<compile_context>
chip_gen: v7x
topology: tpu7x:2x2x1
jax: 0.10.0
libtpu: 0.0.40
codegen_flags: <defaults>
</compile_context>

<pallas_src>
import jax
import jax.numpy as jnp
from jax.experimental import pallas as pl
from jax.experimental.pallas import tpu as pltpu

LANE = 128      # feature dims padded (once, at init) to multiples of this
SUBLANE = 8     # batch tile must be a multiple of this (or equal full dim)
MAX_TN = 512    # output-feature tile cap (multiple of 256: full MXU on v6e/v7x)
MAX_TB = 1024   # hard cap on batch-tile rows


def _cdiv(a, b):
    return (a + b - 1) // b


def _round_up(n, m):
    return _cdiv(n, m) * m


def _vmem_budget_bytes():
    """Generation-aware scoped-VMEM budget (~3/4 of physical per-core VMEM:
    ~96 MiB on v5e/v6e's 128 MiB, ~48 MiB on v7x's 64 MiB)."""
    try:
        cap = int(pltpu.get_tpu_info().vmem_capacity_bytes)
    except Exception:
        cap = 64 * 1024 * 1024
    return min(cap * 3 // 4, 100 * 1024 * 1024)


def output_module_kernel(x_ref, w1_ref, b1_ref, w2_ref, b2_ref, o_ref, h_ref):
    # Layer 0 + ReLU: computed once per batch tile (first N step) and cached in
    # a VMEM scratch in the MXU input dtype; reused for every output tile j.
    @pl.when(pl.program_id(1) == 0)
    def _():
        h = jnp.dot(x_ref[...], w1_ref[...], preferred_element_type=jnp.float32)
        h = jnp.maximum(h + b1_ref[...], 0.0)          # bias + ReLU in f32
        h_ref[...] = h.astype(h_ref.dtype)

    # Layer 1: one (TB, TN) output tile per grid step, f32 accumulation.
    o = jnp.dot(h_ref[...], w2_ref[...], preferred_element_type=jnp.float32)
    o_ref[...] = (o + b2_ref[...]).astype(o_ref.dtype)


def prepare_params(w1, b1, w2, b2, *, compute_dtype=jnp.float32):
    """One-time (init-path) lane padding + dtype cast of the fc parameters.

    w1: [n_in, hidden], b1: [hidden], w2: [hidden, n_out], b2: [n_out].
    Zero padding keeps the math exact (padded hidden cols: 0 + 0 -> relu -> 0,
    and the corresponding w2 rows are zero).
    """
    n_in, hidden = w1.shape
    n_out = w2.shape[1]
    H = _round_up(hidden, LANE)
    N = _round_up(n_out, LANE)

    w1p = jnp.zeros((n_in, H), compute_dtype).at[:, :hidden].set(
        w1.astype(compute_dtype))
    b1p = jnp.zeros((1, H), jnp.float32).at[:, :hidden].set(
        b1.reshape(1, -1).astype(jnp.float32))
    w2p = jnp.zeros((H, N), compute_dtype).at[:hidden, :n_out].set(
        w2.astype(compute_dtype))
    b2p = jnp.zeros((1, N), jnp.float32).at[:, :n_out].set(
        b2.reshape(1, -1).astype(jnp.float32))
    return (w1p, b1p, w2p, b2p), (n_in, hidden, n_out)


def output_module_forward(x, params, dims):
    """Fused Linear -> ReLU -> Linear.  `params`, `dims` from prepare_params()."""
    w1p, b1p, w2p, b2p = params
    n_in, hidden, n_out = dims
    B, K = x.shape
    assert K == n_in, f"x feature dim {K} != n_in {n_in}"
    H = w1p.shape[1]
    N = w2p.shape[1]
    compute_dtype = w1p.dtype
    out_dtype = x.dtype
    in_isz = jnp.dtype(compute_dtype).itemsize
    out_isz = jnp.dtype(out_dtype).itemsize

    # ---- output-feature tile (prefer multiples of 256 for v6e/v7x MXU) ----
    TN = N
    if N > MAX_TN:
        for cand in (512, 384, 256, 128):
            if cand <= MAX_TN and N % cand == 0:
                TN = cand
                break

    # ---- VMEM budget -> batch tile ----
    budget = _vmem_budget_bytes()
    resident = K * H * in_isz + H * 4                   # w1 (Buffered(1)) + b1
    resident += 2 * (H * TN * in_isz + TN * 4)          # w2/b2 tiles, dbl-buffered
    per_row = 2 * K * in_isz + 2 * TN * out_isz + H * in_isz  # x, out, h-scratch
    avail = budget - resident - (2 << 20)
    max_tb = max(SUBLANE, min(MAX_TB, (avail // max(per_row, 1)) // SUBLANE * SUBLANE))

    # ---- batch tiling: balanced tiles, >= 2 steps when B allows (v7x megacore)
    n_b = max(1, min(_cdiv(B, SUBLANE), max(2, _cdiv(B, max_tb))))
    TB = min(_round_up(_cdiv(B, n_b), SUBLANE), _round_up(B, SUBLANE))
    Bp = _round_up(B, TB)

    # x: only the batch may need padding; zero-copy when already aligned.
    if Bp == B and x.dtype == compute_dtype:
        xp = x
    else:
        xp = jnp.zeros((Bp, K), compute_dtype).at[:B].set(x.astype(compute_dtype))

    grid = (Bp // TB, N // TN)

    flops = 2 * Bp * (K * H + H * N)
    bytes_accessed = (Bp * K * in_isz + K * H * in_isz + H * 4
                      + H * N * in_isz + N * 4 + Bp * N * out_isz)
    cost = pl.CostEstimate(flops=flops, transcendentals=0,
                           bytes_accessed=bytes_accessed)

    out = pl.pallas_call(
        output_module_kernel,
        out_shape=jax.ShapeDtypeStruct((Bp, N), out_dtype),
        grid_spec=pltpu.PrefetchScalarGridSpec(
            num_scalar_prefetch=0,
            grid=grid,
            in_specs=[
                # batch-tiled activations: double-buffered across i, resident across j
                pl.BlockSpec((TB, K), lambda i, j: (i, 0)),
                # constant-index layer-0 weights/bias: fetched once, single buffer
                pl.BlockSpec((K, H), lambda i, j: (0, 0),
                             pipeline_mode=pl.Buffered(1)),
                pl.BlockSpec((1, H), lambda i, j: (0, 0),
                             pipeline_mode=pl.Buffered(1)),
                # layer-1 weights/bias tiled along N (pipelined across j)
                pl.BlockSpec((H, TN), lambda i, j: (0, j)),
                pl.BlockSpec((1, TN), lambda i, j: (0, j)),
            ],
            out_specs=pl.BlockSpec((TB, TN), lambda i, j: (i, j)),
            scratch_shapes=[pltpu.VMEM((TB, H), compute_dtype)],
        ),
        compiler_params=pltpu.CompilerParams(
            # Batch tiles shard across TensorCores on v7x; the N axis must stay
            # sequential because the hidden-activation scratch is filled at j==0.
            dimension_semantics=("parallel", "arbitrary"),
            vmem_limit_bytes=int(budget),
        ),
        cost_estimate=cost,
    )(xp, w1p, b1p, w2p, b2p)

    # strip batch + lane padding
    return out[:B, :n_out]


def init_linear(key, fan_in, fan_out, dtype=jnp.float32):
    """Mimics torch.nn.Linear default init: U(-1/sqrt(fan_in), 1/sqrt(fan_in))."""
    kw, kb = jax.random.split(key)
    bound = 1.0 / (fan_in ** 0.5)
    w = jax.random.uniform(kw, (fan_in, fan_out), dtype, minval=-bound, maxval=bound)
    b = jax.random.uniform(kb, (fan_out,), dtype, minval=-bound, maxval=bound)
    return w, b


if __name__ == "__main__":
    # Small shapes consistent with the module: decoder hidden -> out_features.
    B, N_IN, HIDDEN, OUT_FEATURES = 8, 32, 64, 16

    key = jax.random.PRNGKey(0)
    kx, k1, k2 = jax.random.split(key, 3)

    x = jax.random.normal(kx, (B, N_IN), jnp.float32)
    w1, b1 = init_linear(k1, N_IN, HIDDEN)
    w2, b2 = init_linear(k2, HIDDEN, OUT_FEATURES)

    # Pure-JAX reference of the same forward pass.
    ref = jnp.maximum(x @ w1 + b1, 0.0) @ w2 + b2

    # f32 compute path (parameters prepared once, outside the hot path).
    params_f32, dims = prepare_params(w1, b1, w2, b2, compute_dtype=jnp.float32)
    out = jax.block_until_ready(output_module_forward(x, params_f32, dims))
    assert out.shape == (B, OUT_FEATURES)
    assert jnp.allclose(out, ref, atol=1e-4, rtol=1e-4)

    # bf16 MXU-operand path (recommended on v5e/v6e/v7x; f32 accumulation).
    params_bf16, dims_bf16 = prepare_params(w1, b1, w2, b2,
                                            compute_dtype=jnp.bfloat16)
    out_bf16 = jax.block_until_ready(output_module_forward(x, params_bf16,
                                                           dims_bf16))
    assert jnp.allclose(out_bf16, ref, atol=7.5e-2, rtol=7.5e-2)

    print("KERNEL_OK")
</pallas_src>

<mosaic_0001>
module attributes {stable_mosaic.version = 11 : i64} {
  func.func @output_module_kernel(%arg0: i32, %arg1: i32, %arg2: memref<8x32xf32, #tpu.memory_space<vmem>>, %arg3: memref<32x128xf32, #tpu.memory_space<vmem>>, %arg4: memref<1x128xf32, #tpu.memory_space<vmem>>, %arg5: memref<128x128xf32, #tpu.memory_space<vmem>>, %arg6: memref<1x128xf32, #tpu.memory_space<vmem>>, %arg7: memref<8x128xf32, #tpu.memory_space<vmem>>, %arg8: memref<8x128xf32, #tpu.memory_space<vmem>>) attributes {dimension_semantics = [#tpu.dimension_semantics<parallel>, #tpu.dimension_semantics<arbitrary>], iteration_bounds = array<i64: 1, 1>, scalar_prefetch = 0 : i64, scratch_operands = 1 : i64, tpu.core_type = #tpu.core_type<tc>, window_params = [{transform_indices = @transform_0, window_bounds = array<i64: 8, 32>}, {pipeline_mode = #tpu.pipeline_mode<synchronous>, transform_indices = @transform_1, window_bounds = array<i64: 32, 128>}, {pipeline_mode = #tpu.pipeline_mode<synchronous>, transform_indices = @transform_2, window_bounds = array<i64: 1, 128>}, {transform_indices = @transform_3, window_bounds = array<i64: 128, 128>}, {transform_indices = @transform_4, window_bounds = array<i64: 1, 128>}, {transform_indices = @transform_5, window_bounds = array<i64: 8, 128>}]} {
    %c0_i32 = arith.constant 0 : i32
    %0 = arith.cmpi eq, %arg1, %c0_i32 : i32
    %1 = arith.extui %0 : i1 to i32
    %c0_i32_0 = arith.constant 0 : i32
    %2 = arith.cmpi ne, %1, %c0_i32_0 : i32
    scf.if %2 {
      %c0_8 = arith.constant 0 : index
      %c0_9 = arith.constant 0 : index
      %10 = vector.load %arg2[%c0_8, %c0_9] : memref<8x32xf32, #tpu.memory_space<vmem>>, vector<8x32xf32>
      %c0_10 = arith.constant 0 : index
      %c0_11 = arith.constant 0 : index
      %11 = vector.load %arg3[%c0_10, %c0_11] : memref<32x128xf32, #tpu.memory_space<vmem>>, vector<32x128xf32>
      %cst_12 = arith.constant dense<0.000000e+00> : vector<8x128xf32>
      %12 = tpu.matmul %10, %11, %cst_12 {dimension_numbers = #tpu.dot_dimension_numbers<[1], [0], [0], [1], [0, 0, 1, 1], [], []>} : vector<8x32xf32>, vector<32x128xf32>, vector<8x128xf32> -> vector<8x128xf32>
      %c0_13 = arith.constant 0 : index
      %c0_14 = arith.constant 0 : index
      %13 = vector.load %arg4[%c0_13, %c0_14] : memref<1x128xf32, #tpu.memory_space<vmem>>, vector<1x128xf32>
      %14 = vector.broadcast %13 : vector<1x128xf32> to vector<8x128xf32>
      %15 = arith.addf %12, %14 : vector<8x128xf32>
      %cst_15 = arith.constant 0.000000e+00 : f32
      %16 = vector.broadcast %cst_15 : f32 to vector<8x128xf32>
      %17 = arith.maximumf %15, %16 : vector<8x128xf32>
      %c0_16 = arith.constant 0 : index
      %c0_17 = arith.constant 0 : index
      %18 = vector.load %arg8[%c0_16, %c0_17] : memref<8x128xf32, #tpu.memory_space<vmem>>, vector<8x128xf32>
      tpu.vector_store %arg8[%c0_16, %c0_17], %17 {strides = array<i32>} : memref<8x128xf32, #tpu.memory_space<vmem>>, vector<8x128xf32>,
    } else {
    }
    %c0 = arith.constant 0 : index
    %c0_1 = arith.constant 0 : index
    %3 = vector.load %arg8[%c0, %c0_1] : memref<8x128xf32, #tpu.memory_space<vmem>>, vector<8x128xf32>
    %c0_2 = arith.constant 0 : index
    %c0_3 = arith.constant 0 : index
    %4 = vector.load %arg5[%c0_2, %c0_3] : memref<128x128xf32, #tpu.memory_space<vmem>>, vector<128x128xf32>
    %cst = arith.constant dense<0.000000e+00> : vector<8x128xf32>
    %5 = tpu.matmul %3, %4, %cst {dimension_numbers = #tpu.dot_dimension_numbers<[1], [0], [0], [1], [0, 0, 1, 1], [], []>} : vector<8x128xf32>, vector<128x128xf32>, vector<8x128xf32> -> vector<8x128xf32>
    %c0_4 = arith.constant 0 : index
    %c0_5 = arith.constant 0 : index
    %6 = vector.load %arg6[%c0_4, %c0_5] : memref<1x128xf32, #tpu.memory_space<vmem>>, vector<1x128xf32>
    %7 = vector.broadcast %6 : vector<1x128xf32> to vector<8x128xf32>
    %8 = arith.addf %5, %7 : vector<8x128xf32>
    %c0_6 = arith.constant 0 : index
    %c0_7 = arith.constant 0 : index
    %9 = vector.load %arg7[%c0_6, %c0_7] : memref<8x128xf32, #tpu.memory_space<vmem>>, vector<8x128xf32>
    tpu.vector_store %arg7[%c0_6, %c0_7], %8 {strides = array<i32>} : memref<8x128xf32, #tpu.memory_space<vmem>>, vector<8x128xf32>,
    return
  }
  func.func @transform_0(%arg0: i32, %arg1: i32) -> (i32, i32) {
    %c0_i32 = arith.constant 0 : i32
    %c0_i32_0 = arith.constant 0 : i32
    return %arg0, %c0_i32 : i32, i32
  }
  func.func @transform_1(%arg0: i32, %arg1: i32) -> (i32, i32) {
    %c0_i32 = arith.constant 0 : i32
    %c0_i32_0 = arith.constant 0 : i32
    %c0_i32_1 = arith.constant 0 : i32
    return %c0_i32, %c0_i32_0 : i32, i32
  }
  func.func @transform_2(%arg0: i32, %arg1: i32) -> (i32, i32) {
    %c0_i32 = arith.constant 0 : i32
    %c0_i32_0 = arith.constant 0 : i32
    %c0_i32_1 = arith.constant 0 : i32
    return %c0_i32, %c0_i32_0 : i32, i32
  }
  func.func @transform_3(%arg0: i32, %arg1: i32) -> (i32, i32) {
    %c0_i32 = arith.constant 0 : i32
    %c0_i32_0 = arith.constant 0 : i32
    return %c0_i32, %arg1 : i32, i32
  }
  func.func @transform_4(%arg0: i32, %arg1: i32) -> (i32, i32) {
    %c0_i32 = arith.constant 0 : i32
    %c0_i32_0 = arith.constant 0 : i32
    return %c0_i32, %arg1 : i32, i32
  }
  func.func @transform_5(%arg0: i32, %arg1: i32) -> (i32, i32) {
    %c0_i32 = arith.constant 0 : i32
    return %arg0, %arg1 : i32, i32
  }
}

</mosaic_0001>

<llo_original>
// kernel: tpu_custom_call.1
$region0: #{tpu_custom_call.1}
  #allocation0 [shape = 'u32[]', space=smem, size = 0x4, offset = 0x4, fixed_abs, tag = 'smem constant byte address 0x4 - core index']
  #allocation1 [shape = 'u32[144,128]{1,0:T(1,128)}', space=vmem, size = 0x12000, scoped, tag = 'internal scratch']
  #allocation2 [shape = 'f32[8,128]{1,0:T(8,128)}', space=vmem, size = 0x1000, scoped, tag = 'scratch operand']
  %s0 = inlined_call_operand.hbm [shape: f32[8,32], index: 0, kind: input, shape index: {}]
  %s1 = inlined_call_operand.hbm [shape: f32[32,128], index: 1, kind: input, shape index: {}]
  %s2 = inlined_call_operand.vmem [shape: f32[1,128], index: 2, kind: input, shape index: {}]
  %s3 = inlined_call_operand.hbm [shape: f32[128,128], index: 3, kind: input, shape index: {}]
  %s4 = inlined_call_operand.vmem [shape: f32[1,128], index: 4, kind: input, shape index: {}]
  %s5 = inlined_call_operand.hbm [shape: f32[8,128], index: 5, kind: output, shape index: {}]
  %s6 = sld [smem:[#allocation0]]
  $region46: #{tpu_custom_call.1} parent=0
    _
  %s8 = ssub.s32 1, %s6
  %s9 = scalar_select 0, %s8, %s6
  $region1: #{tpu_custom_call.1} parent=0
    #allocation3 [shape = 'u8[4096]{0}', space=vmem, size = 0x1000, scoped, tag = 'input window, operand 0, single buffered']
    #allocation4 [shape = 's32[1]{0}', space=sflag, size = 0x4, scoped, tag = 'scoped memory for tpu_custom_call.1']
    #allocation5 [shape = 's32[1]{0}', space=sflag, size = 0x4, scoped, tag = 'scoped memory for tpu_custom_call.1']
    #allocation6 [shape = 'u8[16384]{0}', space=vmem, size = 0x4000, scoped, tag = 'input window, operand 1, single buffered']
    #allocation7 [shape = 's32[1]{0}', space=sflag, size = 0x4, scoped, tag = 'scoped memory for tpu_custom_call.1']
    #allocation8 [shape = 'u8[65536]{0}', space=vmem, size = 0x10000, scoped, tag = 'input window, operand 3, single buffered']
    #allocation9 [shape = 'u8[4096]{0}', space=vmem, size = 0x1000, scoped, tag = 'output window, operand 0, single buffered']
    %10 = vsyncpa [#allocation4], 0
    %11 = vsyncpa [#allocation7], 0
    %12 = vsyncpa [#allocation5], 0
    // Predicated region
    $region2: #{tpu_custom_call.1} parent=1 // pred_check
      _
    $region3: #{tpu_custom_call.1} parent=1 // pred_check_branch
      %14 = sbr.rel (0) target = $region5
    $region4: #{tpu_custom_call.1} parent=1 // pred_region
      %s16 = ssub.s32 128, 128
      %17 = vsyncadd [#allocation4], %s16
      %s19 = sshll.u32 [#allocation3], 4
      %s20 = int_to_ptr.vmem [resolvable:$true] %s19
      %22 = dma.hbm_to_vmem [thread:$0]  %s0, 128, %s20, [#allocation4]
    $region5: #{tpu_custom_call.1} parent=1 // pred_fallthru
      _
    // Predicated region
    $region6: #{tpu_custom_call.1} parent=1 // pred_check
      _
    $region7: #{tpu_custom_call.1} parent=1 // pred_check_branch
      %24 = sbr.rel (0) target = $region9
    $region8: #{tpu_custom_call.1} parent=1 // pred_region
      %s26 = ssub.s32 512, 512
      %27 = vsyncadd [#allocation7], %s26
      %s28 = sshll.u32 [#allocation6], 4
      %s29 = int_to_ptr.vmem [resolvable:$true] %s28
      %34 = dma.hbm_to_vmem [thread:$0]  %s1, 512, %s29, [#allocation7], 128, 128, 8
    $region9: #{tpu_custom_call.1} parent=1 // pred_fallthru
      _
    // Predicated region
    $region10: #{tpu_custom_call.1} parent=1 // pred_check
      _
    $region11: #{tpu_custom_call.1} parent=1 // pred_check_branch
      %36 = sbr.rel (0) target = $region13
    $region12: #{tpu_custom_call.1} parent=1 // pred_region
      _
    $region13: #{tpu_custom_call.1} parent=1 // pred_fallthru
      _
    // Predicated region
    $region14: #{tpu_custom_call.1} parent=1 // pred_check
      _
    $region15: #{tpu_custom_call.1} parent=1 // pred_check_branch
      %38 = sbr.rel (0) target = $region17
    $region16: #{tpu_custom_call.1} parent=1 // pred_region
      %s40 = ssub.s32 2048, 2048
      %41 = vsyncadd [#allocation7], %s40
      %s42 = sshll.u32 [#allocation8], 4
      %s43 = int_to_ptr.vmem [resolvable:$true] %s42
      %48 = dma.hbm_to_vmem [thread:$0]  %s3, 2048, %s43, [#allocation7], 128, 128, 8
    $region17: #{tpu_custom_call.1} parent=1 // pred_fallthru
      _
    // Predicated region
    $region18: #{tpu_custom_call.1} parent=1 // pred_check
      _
    $region19: #{tpu_custom_call.1} parent=1 // pred_check_branch
      %50 = sbr.rel (0) target = $region21
    $region20: #{tpu_custom_call.1} parent=1 // pred_region
      _
    $region21: #{tpu_custom_call.1} parent=1 // pred_fallthru
      _
    // Predicated region
    $region22: #{tpu_custom_call.1} parent=1 // pred_check
      _
    $region23: #{tpu_custom_call.1} parent=1 // pred_check_branch
      %52 = sbr.rel (0) target = $region25
    $region24: #{tpu_custom_call.1} parent=1 // pred_region
      %53 = dma.done [#allocation4], 128
    $region25: #{tpu_custom_call.1} parent=1 // pred_fallthru
      _
    // Predicated region
    $region26: #{tpu_custom_call.1} parent=1 // pred_check
      _
    $region27: #{tpu_custom_call.1} parent=1 // pred_check_branch
      %55 = sbr.rel (0) target = $region29
    $region28: #{tpu_custom_call.1} parent=1 // pred_region
      %56 = dma.done [#allocation7], 512
    $region29: #{tpu_custom_call.1} parent=1 // pred_fallthru
      _
    // Predicated region
    $region30: #{tpu_custom_call.1} parent=1 // pred_check
      _
    $region31: #{tpu_custom_call.1} parent=1 // pred_check_branch
      %58 = sbr.rel (0) target = $region33
    $region32: #{tpu_custom_call.1} parent=1 // pred_region
      %59 = dma.done [#allocation7], 2048
    $region33: #{tpu_custom_call.1} parent=1 // pred_fallthru
      _
    %p60 = scmp.eq.s32.totalorder 0, 0
    // Predicated region
    $region34: #{tpu_custom_call.1} parent=1 // pred_check
      %p61 = pneg %p60
    $region35: #{tpu_custom_call.1} parent=1 // pred_check_branch
      %63 = sbr.rel (%p61) target = $region37
    $region36: #{tpu_custom_call.1} parent=1 // pred_region
      %v64 = vld [vmem:[#allocation3] sm:$0xff]
      %v65 = vld [vmem:[#allocation6] sm:$0xff]
      %v66 = vld [vmem:[#allocation6 + $0x8] sm:$0xff]
      %v67 = vld [vmem:[#allocation6 + $0x10] sm:$0xff]
      %v68 = vld [vmem:[#allocation6 + $0x18] sm:$0xff]
      %v69 = vld [vmem:[%s2] sm:$0x1]
      %v71 = vlaneseq
      %v72 = vshrl.u32 %v71, 7
      %v73 = vsub.s32 0, %v72
      %v74 = vrot.slane %v69, %v73
      %vm76 = vcmask 261120
      %v78 = vsel %vm76, %v64, 0
      %80 = vmatprep.subr.mxu0 0.0
      %81 = vmatpush1.msra.mxu0 %v65
      %82 = vmatprep.subr.mxu0 0.0
      %83 = vmatpush1.msra.mxu0 %v66
      %84 = vmatprep.subr.mxu0 0.0
      %85 = vmatpush1.msra.mxu0 %v67
      %86 = vmatprep.subr.mxu0 0.0
      %87 = vmatpush1.msra.mxu0 %v68
      %88 = vmatprep.subr.mxu0 0.0
      %89 = vmatpush1.msra.mxu0 0.0
      %90 = vmatprep.subr.mxu0 0.0
      %91 = vmatpush1.msra.mxu0 0.0
      %92 = vmatprep.subr.mxu0 0.0
      %93 = vmatpush1.msra.mxu0 0.0
      %94 = vmatprep.subr.mxu0 0.0
      %95 = vmatpush1.msra.mxu0 0.0
      %96 = vmatprep.subr.mxu0 0.0
      %97 = vmatpush1.msra.mxu0 0.0
      %98 = vmatprep.subr.mxu0 0.0
      %99 = vmatpush1.msra.mxu0 0.0
      %100 = vmatprep.subr.mxu0 0.0
      %101 = vmatpush1.msra.mxu0 0.0
      %102 = vmatprep.subr.mxu0 0.0
      %103 = vmatpush1.msra.mxu0 0.0
      %104 = vmatprep.subr.mxu0 0.0
      %105 = vmatpush1.msra.mxu0 0.0
      %106 = vmatprep.subr.mxu0 0.0
      %107 = vmatpush1.msra.mxu0 0.0
      %108 = vmatprep.subr.mxu0 0.0
      %109 = vmatpush1.msra.mxu0 0.0
      %110 = vmatprep.subr.mxu0 0.0
      %111 = vmatpush1.msra.mxu0 0.0
      %112 = vmatprep.subr.mxu0 0.0
      %113 = vmatpush1.msra.mxu0 0.0
      %114 = vmatprep.subr.mxu0 0.0
      %115 = vmatpush1.msra.mxu0 0.0
      %116 = vmatprep.subr.mxu0 0.0
      %117 = vmatpush1.msra.mxu0 0.0
      %118 = vmatprep.subr.mxu0 0.0
      %119 = vmatpush1.msra.mxu0 0.0
      %120 = vmatprep.subr.mxu0 0.0
      %121 = vmatpush1.msra.mxu0 0.0
      %122 = vmatprep.subr.mxu0 0.0
      %123 = vmatpush1.msra.mxu0 0.0
      %124 = vmatprep.subr.mxu0 0.0
      %125 = vmatpush1.msra.mxu0 0.0
      %126 = vmatprep.subr.mxu0 0.0
      %127 = vmatpush1.msra.mxu0 0.0
      %128 = vmatprep.subr.mxu0 0.0
      %129 = vmatpush1.msra.mxu0 0.0
      %130 = vmatprep.subr.mxu0 0.0
      %131 = vmatpush1.msra.mxu0 0.0
      %132 = vmatprep.subr.mxu0 0.0
      %133 = vmatpush1.msra.mxu0 0.0
      %134 = vmatprep.subr.mxu0 0.0
      %135 = vmatpush1.msra.mxu0 0.0
      %136 = vmatprep.subr.mxu0 0.0
      %137 = vmatpush1.msra.mxu0 0.0
      %138 = vmatprep.subr.mxu0 0.0
      %139 = vmatpush1.msra.mxu0 0.0
      %140 = vmatprep.subr.mxu0 0.0
      %141 = vmatpush1.msra.mxu0 0.0
      %142 = vmatprep.subr.mxu0 0.0
      %143 = vmatpush1.msra.mxu0 0.0
      %144 = vmatprep.mubr.f32.mxu0 0.0
      %145 = vmatmul.mubr.f32.gmra.mrb[0].mxu0 %v78
      %v146 = vpop.f32.mrb[0].mxu0
      %v147 = vadd.f32 %v74, %v146
      %v148 = vpop.f32.mrb[0].mxu0
      %149 = vdwg.mxu0
      %v150 = vmax.f32 %v147, 0.0
      %151 = vst [vmem:[#allocation2] sm:$0xff] %v150
    $region37: #{tpu_custom_call.1} parent=1 // pred_fallthru
      _
    %v152 = vld [vmem:[#allocation2] sm:$0xff]
    %v153 = vld [vmem:[#allocation8] sm:$0xff]
    %v154 = vld [vmem:[#allocation8 + $0x8] sm:$0xff]
    %v155 = vld [vmem:[#allocation8 + $0x10] sm:$0xff]
    %v156 = vld [vmem:[#allocation8 + $0x18] sm:$0xff]
    %v157 = vld [vmem:[#allocation8 + $0x20] sm:$0xff]
    %v158 = vld [vmem:[#allocation8 + $0x28] sm:$0xff]
    %v159 = vld [vmem:[#allocation8 + $0x30] sm:$0xff]
    %v160 = vld [vmem:[#allocation8 + $0x38] sm:$0xff]
    %v161 = vld [vmem:[#allocation8 + $0x40] sm:$0xff]
    %v162 = vld [vmem:[#allocation8 + $0x48] sm:$0xff]
    %v163 = vld [vmem:[#allocation8 + $0x50] sm:$0xff]
    %v164 = vld [vmem:[#allocation8 + $0x58] sm:$0xff]
    %v165 = vld [vmem:[#allocation8 + $0x60] sm:$0xff]
    %v166 = vld [vmem:[#allocation8 + $0x68] sm:$0xff]
    %v167 = vld [vmem:[#allocation8 + $0x70] sm:$0xff]
    %v168 = vld [vmem:[#allocation8 + $0x78] sm:$0xff]
    %v169 = vld [vmem:[%s4] sm:$0x1]
    %v171 = vlaneseq
    %v172 = vshrl.u32 %v171, 7
    %v173 = vsub.s32 0, %v172
    %v174 = vrot.slane %v169, %v173
    %176 = vmatprep.subr.mxu0 0.0
    %177 = vmatpush1.msra.mxu0 %v153
    %178 = vmatprep.subr.mxu0 0.0
    %179 = vmatpush1.msra.mxu0 %v154
    %180 = vmatprep.subr.mxu0 0.0
    %181 = vmatpush1.msra.mxu0 %v155
    %182 = vmatprep.subr.mxu0 0.0
    %183 = vmatpush1.msra.mxu0 %v156
    %184 = vmatprep.subr.mxu0 0.0
    %185 = vmatpush1.msra.mxu0 %v157
    %186 = vmatprep.subr.mxu0 0.0
    %187 = vmatpush1.msra.mxu0 %v158
    %188 = vmatprep.subr.mxu0 0.0
    %189 = vmatpush1.msra.mxu0 %v159
    %190 = vmatprep.subr.mxu0 0.0
    %191 = vmatpush1.msra.mxu0 %v160
    %192 = vmatprep.subr.mxu0 0.0
    %193 = vmatpush1.msra.mxu0 %v161
    %194 = vmatprep.subr.mxu0 0.0
    %195 = vmatpush1.msra.mxu0 %v162
    %196 = vmatprep.subr.mxu0 0.0
    %197 = vmatpush1.msra.mxu0 %v163
    %198 = vmatprep.subr.mxu0 0.0
    %199 = vmatpush1.msra.mxu0 %v164
    %200 = vmatprep.subr.mxu0 0.0
    %201 = vmatpush1.msra.mxu0 %v165
    %202 = vmatprep.subr.mxu0 0.0
    %203 = vmatpush1.msra.mxu0 %v166
    %204 = vmatprep.subr.mxu0 0.0
    %205 = vmatpush1.msra.mxu0 %v167
    %206 = vmatprep.subr.mxu0 0.0
    %207 = vmatpush1.msra.mxu0 %v168
    %208 = vmatprep.subr.mxu0 0.0
    %209 = vmatpush1.msra.mxu0 0.0
    %210 = vmatprep.subr.mxu0 0.0
    %211 = vmatpush1.msra.mxu0 0.0
    %212 = vmatprep.subr.mxu0 0.0
    %213 = vmatpush1.msra.mxu0 0.0
    %214 = vmatprep.subr.mxu0 0.0
    %215 = vmatpush1.msra.mxu0 0.0
    %216 = vmatprep.subr.mxu0 0.0
    %217 = vmatpush1.msra.mxu0 0.0
    %218 = vmatprep.subr.mxu0 0.0
    %219 = vmatpush1.msra.mxu0 0.0
    %220 = vmatprep.subr.mxu0 0.0
    %221 = vmatpush1.msra.mxu0 0.0
    %222 = vmatprep.subr.mxu0 0.0
    %223 = vmatpush1.msra.mxu0 0.0
    %224 = vmatprep.subr.mxu0 0.0
    %225 = vmatpush1.msra.mxu0 0.0
    %226 = vmatprep.subr.mxu0 0.0
    %227 = vmatpush1.msra.mxu0 0.0
    %228 = vmatprep.subr.mxu0 0.0
    %229 = vmatpush1.msra.mxu0 0.0
    %230 = vmatprep.subr.mxu0 0.0
    %231 = vmatpush1.msra.mxu0 0.0
    %232 = vmatprep.subr.mxu0 0.0
    %233 = vmatpush1.msra.mxu0 0.0
    %234 = vmatprep.subr.mxu0 0.0
    %235 = vmatpush1.msra.mxu0 0.0
    %236 = vmatprep.subr.mxu0 0.0
    %237 = vmatpush1.msra.mxu0 0.0
    %238 = vmatprep.subr.mxu0 0.0
    %239 = vmatpush1.msra.mxu0 0.0
    %240 = vmatprep.mubr.f32.mxu0 0.0
    %241 = vmatmul.mubr.f32.gmra.mrb[0].mxu0 %v152
    %v242 = vpop.f32.mrb[0].mxu0
    %v243 = vadd.f32 %v174, %v242
    %v244 = vpop.f32.mrb[0].mxu0
    %245 = vdwg.mxu0
    %246 = vst [vmem:[#allocation9] sm:$0xff] %v243
    // Predicated region
    $region38: #{tpu_custom_call.1} parent=1 // pred_check
      _
    $region39: #{tpu_custom_call.1} parent=1 // pred_check_branch
      %248 = sbr.rel (0) target = $region41
    $region40: #{tpu_custom_call.1} parent=1 // pred_region
      %s250 = ssub.s32 128, 128
      %251 = vsyncadd [#allocation5], %s250
      %s253 = sshll.u32 [#allocation9], 4
      %s254 = int_to_ptr.vmem [resolvable:$true] %s253
      %256 = dma.vmem_to_hbm [thread:$0]  %s254, 128, %s5, [#allocation5]
    $region41: #{tpu_custom_call.1} parent=1 // pred_fallthru
      _
    // Predicated region
    $region42: #{tpu_custom_call.1} parent=1 // pred_check
      _
    $region43: #{tpu_custom_call.1} parent=1 // pred_check_branch
      %258 = sbr.rel (0) target = $region45
    $region44: #{tpu_custom_call.1} parent=1 // pred_region
      %259 = dma.done [#allocation5], 128
    $region45: #{tpu_custom_call.1} parent=1 // pred_fallthru
      _
    %260 = vsyncpa [#allocation4], 1
    %261 = vsyncpa [#allocation7], 1
    %262 = vsyncpa [#allocation5], 1

</llo_original>
